<compile_context>
chip_gen: v7x
topology: tpu7x:2x2x1
jax: 0.10.0
libtpu: 0.0.40
codegen_flags: <defaults>
</compile_context>

<pallas_src>
import math

import jax
import jax.numpy as jnp
from jax.experimental import pallas as pl
from jax.experimental.pallas import tpu as pltpu


def mlp_kernel(x_ref, w1_ref, b1_ref, w2_ref, b2_ref, o_ref):
    # fc1: [tm, Kp] @ [Kp, Hp] with f32 accumulation on the MXU.
    h = jnp.dot(x_ref[...], w1_ref[...], preferred_element_type=jnp.float32)
    # bias + ReLU in f32 (correct on all generations incl. v5e).
    h = jnp.maximum(h + b1_ref[...], 0.0)
    # dropout(p=0.05) in eval mode -> identity.
    # fc2: [tm, Hp] @ [Hp, Np]
    out = jnp.dot(h.astype(w2_ref.dtype), w2_ref[...],
                  preferred_element_type=jnp.float32)
    o_ref[...] = (out + b2_ref[...]).astype(o_ref.dtype)


def mlp_forward(x, w1, b1, w2, b2, *, target_steps=8, max_rows_per_step=2048,
                stream_dtype=None):
    """x: [N, Din]; w1: [Din, H]; b1: [H]; w2: [H, Dout]; b2: [Dout].

    N is the total number of rows/windows folded together (batch * windows).
    stream_dtype: optionally cast x / weights (e.g. jnp.bfloat16) to halve HBM
    traffic; accumulation and the bias/ReLU epilogue remain f32.
    """
    N, Din = x.shape
    H = w1.shape[1]
    Dout = w2.shape[1]
    out_dtype = x.dtype

    if stream_dtype is not None:
        x = x.astype(stream_dtype)
        w1 = w1.astype(stream_dtype)
        w2 = w2.astype(stream_dtype)

    # ---- lane-dense packing factor -----------------------------------------
    # Fold P original rows into one 128-lane packed row (free row-major reshape)
    # and use block-diagonal weights so every tile is lane-dense and the MXU
    # contraction dim becomes P*Din instead of Din.
    if Din < 128 and (128 % Din == 0):
        P = 128 // Din
    else:
        P = 1

    if P > 1:
        w1p = jnp.kron(jnp.eye(P, dtype=w1.dtype), w1)            # [P*Din, P*H]
        w2p = jnp.kron(jnp.eye(P, dtype=w2.dtype), w2)            # [P*H, P*Dout]
        b1p = jnp.tile(b1.astype(jnp.float32), P).reshape(1, P * H)
        b2p = jnp.tile(b2.astype(jnp.float32), P).reshape(1, P * Dout)
    else:
        w1p, w2p = w1, w2
        b1p = b1.reshape(1, H).astype(jnp.float32)
        b2p = b2.reshape(1, Dout).astype(jnp.float32)

    Kp, Hp, Np = P * Din, P * H, P * Dout

    # Pad rows to a multiple of P, then pack (free reshape).
    n_rows_pad = pl.cdiv(N, P) * P
    if n_rows_pad != N:
        x = jnp.pad(x, ((0, n_rows_pad - N), (0, 0)))
    n_packed = n_rows_pad // P
    xp = x.reshape(n_packed, Kp)

    # ---- row tile / grid -----------------------------------------------------
    # >= target_steps grid steps (v7x: 2 TCs * >=4 steps each) when the data
    # allows, tile a multiple of 8 sublanes, capped by max_rows_per_step rows.
    max_tile = max(8, max_rows_per_step // P)
    tm = max(8, min(max_tile, pl.cdiv(n_packed, target_steps)))
    tm = pl.cdiv(tm, 8) * 8
    n_pad = pl.cdiv(n_packed, tm) * tm
    if n_pad != n_packed:
        xp = jnp.pad(xp, ((0, n_pad - n_packed), (0, 0)))
    grid = (n_pad // tm,)

    # ---- cost estimate & VMEM budget ----------------------------------------
    x_item = jnp.dtype(xp.dtype).itemsize
    o_item = jnp.dtype(out_dtype).itemsize

    def nbytes(shape, dt):
        return math.prod(shape) * jnp.dtype(dt).itemsize

    cost = pl.CostEstimate(
        flops=2 * n_pad * (Kp * Hp + Hp * Np),
        transcendentals=0,
        bytes_accessed=(n_pad * Kp * x_item + n_pad * Np * o_item
                        + nbytes(w1p.shape, w1p.dtype) + nbytes(w2p.shape, w2p.dtype)
                        + nbytes(b1p.shape, b1p.dtype) + nbytes(b2p.shape, b2p.dtype)),
    )

    # BlockSpec inputs are double-buffered even with a constant index_map, so
    # budget 2x for everything that is streamed or resident, plus the live f32
    # intermediates; keep the scoped limit well inside v7x's 64 MiB physical.
    vmem_needed = (
        2 * nbytes((tm, Kp), xp.dtype)
        + 2 * nbytes((tm, Np), out_dtype)
        + 2 * (nbytes(w1p.shape, w1p.dtype) + nbytes(w2p.shape, w2p.dtype))
        + 2 * (nbytes(b1p.shape, b1p.dtype) + nbytes(b2p.shape, b2p.dtype))
        + nbytes((tm, Hp), jnp.float32)
        + nbytes((tm, Np), jnp.float32)
    )
    vmem_limit = int(min(64 * 2**20, max(32 * 2**20, 2 * vmem_needed)))

    out = pl.pallas_call(
        mlp_kernel,
        out_shape=jax.ShapeDtypeStruct((n_pad, Np), out_dtype),
        grid=grid,
        in_specs=[
            # streamed, lane-dense x tile
            pl.BlockSpec((tm, Kp), lambda i: (i, 0)),
            # weights / biases: constant block index -> VMEM resident
            pl.BlockSpec((Kp, Hp), lambda i: (0, 0)),
            pl.BlockSpec((1, Hp), lambda i: (0, 0)),
            pl.BlockSpec((Hp, Np), lambda i: (0, 0)),
            pl.BlockSpec((1, Np), lambda i: (0, 0)),
        ],
        out_specs=pl.BlockSpec((tm, Np), lambda i: (i, 0)),
        compiler_params=pltpu.CompilerParams(
            dimension_semantics=("parallel",),
            vmem_limit_bytes=vmem_limit,
        ),
        cost_estimate=cost,
    )(xp, w1p, b1p, w2p, b2p)

    # Unpack: [n_packed, P*Dout] -> [n_rows_pad, Dout] is a free reshape.
    out = out[:n_packed].reshape(n_rows_pad, Dout)
    return out[:N] if n_rows_pad != N else out


def init_mlp_params(key, input_size, hidden_size, output_size, dtype=jnp.float32):
    """Deterministic init mimicking nn.Linear's U(-1/sqrt(fan_in), 1/sqrt(fan_in))."""
    k1, k2, k3, k4 = jax.random.split(key, 4)
    bound1 = 1.0 / (input_size ** 0.5)
    bound2 = 1.0 / (hidden_size ** 0.5)
    # stored pre-transposed: [Din, H] and [H, Dout]
    w1 = jax.random.uniform(k1, (input_size, hidden_size), dtype, -bound1, bound1)
    b1 = jax.random.uniform(k2, (hidden_size,), dtype, -bound1, bound1)
    w2 = jax.random.uniform(k3, (hidden_size, output_size), dtype, -bound2, bound2)
    b2 = jax.random.uniform(k4, (output_size,), dtype, -bound2, bound2)
    return w1, b1, w2, b2


if __name__ == "__main__":
    key = jax.random.PRNGKey(0)
    k_x, k_p = jax.random.split(key)

    # Many independent LTFAD windows folded into one row dimension so the kernel
    # gets a real grid (8 steps) and lane-dense (tm, 128) tiles after packing.
    N_ROWS, D_IN, D_HID, D_OUT = 4096, 16, 32, 16

    x = jax.random.normal(k_x, (N_ROWS, D_IN), jnp.float32)
    w1, b1, w2, b2 = init_mlp_params(k_p, D_IN, D_HID, D_OUT)

    # reference in plain JAX (eval-mode dropout == identity)
    ref = jnp.maximum(x @ w1 + b1, 0.0) @ w2 + b2

    # f32 path: tight check
    out = mlp_forward(x, w1, b1, w2, b2)
    out = jax.block_until_ready(out)
    assert out.shape == (N_ROWS, D_OUT)
    assert jnp.allclose(out, ref, atol=1e-4, rtol=1e-4)

    # bf16-streamed path: halves HBM read traffic, f32 accumulation/epilogue.
    out_bf16 = mlp_forward(x, w1, b1, w2, b2, stream_dtype=jnp.bfloat16)
    out_bf16 = jax.block_until_ready(out_bf16)
    assert out_bf16.shape == (N_ROWS, D_OUT)
    assert jnp.allclose(out_bf16, ref, atol=5e-2, rtol=5e-2)

    print("KERNEL_OK")
</pallas_src>

<mosaic_0001>
module attributes {stable_mosaic.version = 11 : i64} {
  func.func @mlp_kernel(%arg0: i32, %arg1: memref<64x128xf32, #tpu.memory_space<vmem>>, %arg2: memref<128x256xf32, #tpu.memory_space<vmem>>, %arg3: memref<1x256xf32, #tpu.memory_space<vmem>>, %arg4: memref<256x128xf32, #tpu.memory_space<vmem>>, %arg5: memref<1x128xf32, #tpu.memory_space<vmem>>, %arg6: memref<64x128xf32, #tpu.memory_space<vmem>>) attributes {dimension_semantics = [#tpu.dimension_semantics<parallel>], iteration_bounds = array<i64: 8>, scalar_prefetch = 0 : i64, scratch_operands = 0 : i64, tpu.core_type = #tpu.core_type<tc>, window_params = [{transform_indices = @transform_0, window_bounds = array<i64: 64, 128>}, {pipeline_mode = #tpu.pipeline_mode<synchronous>, transform_indices = @transform_1, window_bounds = array<i64: 128, 256>}, {pipeline_mode = #tpu.pipeline_mode<synchronous>, transform_indices = @transform_2, window_bounds = array<i64: 1, 256>}, {pipeline_mode = #tpu.pipeline_mode<synchronous>, transform_indices = @transform_3, window_bounds = array<i64: 256, 128>}, {pipeline_mode = #tpu.pipeline_mode<synchronous>, transform_indices = @transform_4, window_bounds = array<i64: 1, 128>}, {transform_indices = @transform_5, window_bounds = array<i64: 64, 128>}]} {
    %c0 = arith.constant 0 : index
    %c0_0 = arith.constant 0 : index
    %0 = vector.load %arg1[%c0, %c0_0] : memref<64x128xf32, #tpu.memory_space<vmem>>, vector<64x128xf32>
    %c0_1 = arith.constant 0 : index
    %c0_2 = arith.constant 0 : index
    %1 = vector.load %arg2[%c0_1, %c0_2] : memref<128x256xf32, #tpu.memory_space<vmem>>, vector<128x256xf32>
    %cst = arith.constant dense<0.000000e+00> : vector<64x256xf32>
    %2 = tpu.matmul %0, %1, %cst {dimension_numbers = #tpu.dot_dimension_numbers<[1], [0], [0], [1], [0, 0, 1, 1], [], []>} : vector<64x128xf32>, vector<128x256xf32>, vector<64x256xf32> -> vector<64x256xf32>
    %c0_3 = arith.constant 0 : index
    %c0_4 = arith.constant 0 : index
    %3 = vector.load %arg3[%c0_3, %c0_4] : memref<1x256xf32, #tpu.memory_space<vmem>>, vector<1x256xf32>
    %4 = vector.broadcast %3 : vector<1x256xf32> to vector<64x256xf32>
    %5 = arith.addf %2, %4 : vector<64x256xf32>
    %cst_5 = arith.constant 0.000000e+00 : f32
    %6 = vector.broadcast %cst_5 : f32 to vector<64x256xf32>
    %7 = arith.maximumf %5, %6 : vector<64x256xf32>
    %c0_6 = arith.constant 0 : index
    %c0_7 = arith.constant 0 : index
    %8 = vector.load %arg4[%c0_6, %c0_7] : memref<256x128xf32, #tpu.memory_space<vmem>>, vector<256x128xf32>
    %cst_8 = arith.constant dense<0.000000e+00> : vector<64x128xf32>
    %9 = tpu.matmul %7, %8, %cst_8 {dimension_numbers = #tpu.dot_dimension_numbers<[1], [0], [0], [1], [0, 0, 1, 1], [], []>} : vector<64x256xf32>, vector<256x128xf32>, vector<64x128xf32> -> vector<64x128xf32>
    %c0_9 = arith.constant 0 : index
    %c0_10 = arith.constant 0 : index
    %10 = vector.load %arg5[%c0_9, %c0_10] : memref<1x128xf32, #tpu.memory_space<vmem>>, vector<1x128xf32>
    %11 = vector.broadcast %10 : vector<1x128xf32> to vector<64x128xf32>
    %12 = arith.addf %9, %11 : vector<64x128xf32>
    %c0_11 = arith.constant 0 : index
    %c0_12 = arith.constant 0 : index
    %13 = vector.load %arg6[%c0_11, %c0_12] : memref<64x128xf32, #tpu.memory_space<vmem>>, vector<64x128xf32>
    tpu.vector_store %arg6[%c0_11, %c0_12], %12 {strides = array<i32>} : memref<64x128xf32, #tpu.memory_space<vmem>>, vector<64x128xf32>,
    return
  }
  func.func @transform_0(%arg0: i32) -> (i32, i32) {
    %c0_i32 = arith.constant 0 : i32
    %c0_i32_0 = arith.constant 0 : i32
    return %arg0, %c0_i32 : i32, i32
  }
  func.func @transform_1(%arg0: i32) -> (i32, i32) {
    %c0_i32 = arith.constant 0 : i32
    %c0_i32_0 = arith.constant 0 : i32
    %c0_i32_1 = arith.constant 0 : i32
    return %c0_i32, %c0_i32_0 : i32, i32
  }
  func.func @transform_2(%arg0: i32) -> (i32, i32) {
    %c0_i32 = arith.constant 0 : i32
    %c0_i32_0 = arith.constant 0 : i32
    %c0_i32_1 = arith.constant 0 : i32
    return %c0_i32, %c0_i32_0 : i32, i32
  }
  func.func @transform_3(%arg0: i32) -> (i32, i32) {
    %c0_i32 = arith.constant 0 : i32
    %c0_i32_0 = arith.constant 0 : i32
    %c0_i32_1 = arith.constant 0 : i32
    return %c0_i32, %c0_i32_0 : i32, i32
  }
  func.func @transform_4(%arg0: i32) -> (i32, i32) {
    %c0_i32 = arith.constant 0 : i32
    %c0_i32_0 = arith.constant 0 : i32
    %c0_i32_1 = arith.constant 0 : i32
    return %c0_i32, %c0_i32_0 : i32, i32
  }
  func.func @transform_5(%arg0: i32) -> (i32, i32) {
    %c0_i32 = arith.constant 0 : i32
    %c0_i32_0 = arith.constant 0 : i32
    return %arg0, %c0_i32 : i32, i32
  }
}

</mosaic_0001>

<llo_original>
// kernel: tpu_custom_call.1
$region0: #{tpu_custom_call.1}
  #allocation0 [shape = 'u32[]', space=smem, size = 0x4, offset = 0x4, fixed_abs, tag = 'smem constant byte address 0x4 - core index']
  #allocation1 [shape = 'u32[144,128]{1,0:T(1,128)}', space=vmem, size = 0x12000, scoped, tag = 'internal scratch']
  %s0 = inlined_call_operand.hbm [shape: f32[512,128], index: 0, kind: input, shape index: {}]
  %s1 = inlined_call_operand.hbm [shape: f32[128,256], index: 1, kind: input, shape index: {}]
  %s2 = inlined_call_operand.vmem [shape: f32[1,256], index: 2, kind: input, shape index: {}]
  %s3 = inlined_call_operand.hbm [shape: f32[256,128], index: 3, kind: input, shape index: {}]
  %s4 = inlined_call_operand.vmem [shape: f32[1,128], index: 4, kind: input, shape index: {}]
  %s5 = inlined_call_operand.hbm [shape: f32[512,128], index: 5, kind: output, shape index: {}]
  %s6 = sld [smem:[#allocation0]]
  $region65: #{tpu_custom_call.1} parent=0
    _
  %s8 = ssub.s32 1, %s6
  %s9 = scalar_select 0, %s8, %s6
  $region1: #{tpu_custom_call.1} parent=0
    #allocation2 [shape = 'u8[65536]{0}', space=vmem, size = 0x10000, scoped, tag = 'input window, operand 0']
    #allocation3 [shape = 's32[2]{0}', space=sflag, size = 0x8, scoped, tag = 'scoped memory for tpu_custom_call.1']
    #allocation4 [shape = 's32[2]{0}', space=sflag, size = 0x8, scoped, tag = 'scoped memory for tpu_custom_call.1']
    #allocation5 [shape = 'u8[131072]{0}', space=vmem, size = 0x20000, scoped, tag = 'input window, operand 1, single buffered']
    #allocation6 [shape = 's32[1]{0}', space=sflag, size = 0x4, scoped, tag = 'scoped memory for tpu_custom_call.1']
    #allocation7 [shape = 'u8[131072]{0}', space=vmem, size = 0x20000, scoped, tag = 'input window, operand 3, single buffered']
    #allocation8 [shape = 'u8[65536]{0}', space=vmem, size = 0x10000, scoped, tag = 'output window, operand 0']
    %10 = vsyncpa [#allocation3], 0
    %s11 = scalar_lea.sflag [#allocation3], 1
    %12 = vsyncpa %s11, 0
    %13 = vsyncpa [#allocation6], 0
    %14 = vsyncpa [#allocation4], 0
    %s15 = scalar_lea.sflag [#allocation4], 1
    %16 = vsyncpa %s15, 0
    loop: start=0, step=1, limit=10
    $region2: #{tpu_custom_call.1} parent=1 // loop_pre_header
      _
    $region3: #{tpu_custom_call.1} parent=1 // loop_header
      %s18 = sphi 0, %s22
      %p19 = scmp.ge.s32.totalorder %s18, 10
      %s28 = sphi 0, %s30
      %s31 = sphi 0, %s28
      %s32 = sphi 0, %s31
      %s48 = sphi 0, %s32
      %s52 = sphi 0, %s52
      %s54 = sphi 0, %s52
      %s55 = sphi 0, %s54
      %s69 = sphi 0, %s55
      %s73 = sphi 0, %s73
      %s75 = sphi 0, %s73
      %s76 = sphi 0, %s75
      %s90 = sphi 0, %s76
      %s94 = sphi 0, %s94
      %s96 = sphi 0, %s94
      %s97 = sphi 0, %s96
      %s111 = sphi 0, %s97
      %s115 = sphi 0, %s115
      %s117 = sphi 0, %s115
      %s118 = sphi 0, %s117
      %s132 = sphi 0, %s118
      %s138 = sphi 0, %s140
      %s141 = sphi 0, %s138
      %s142 = sphi 0, %s141
      %s158 = sphi 0, %s142
    $region4: #{tpu_custom_call.1} parent=1 // loop_header_branch
      %21 = sbr.rel (%p19) target = $region8
    $region5: #{tpu_custom_call.1} parent=1 // loop_body
      %s23 = ssub.s32 %s18, 1
      %s24 = ssub.s32 %s18, 2
      %s25 = sadd.s32 %s18, 1
      %s26 = ssub.s32 %s18, %s25
      %p27 = scmp.eq.s32.totalorder %s26, 0
      %s29 = sadd.s32 %s28, 1
      %s30 = scalar_select %p27, %s28, %s29
      %p33 = pneg %p27
      %p34 = scmp.eq.s32.totalorder %s18, 7
      %p35 = por %p33, %p34
      %p36 = scmp.ne.s32.totalorder %s28, %s31
      %p37 = scmp.eq.s32.totalorder %s18, 0
      %p38 = por %p36, %p37
      %p39 = scmp.ne.s32.totalorder %s28, %s31
      %p40 = scmp.eq.s32.totalorder %s23, 7
      %p41 = por %p39, %p40
      %p42 = scmp.ne.s32.totalorder %s31, %s32
      %p43 = scmp.eq.s32.totalorder %s23, 0
      %p44 = por %p42, %p43
      %p45 = scmp.ne.s32.totalorder %s31, %s32
      %p46 = scmp.eq.s32.totalorder %s24, 7
      %p47 = por %p45, %p46
      %p49 = scmp.ne.s32.totalorder %s32, %s48
      %p50 = scmp.eq.s32.totalorder %s24, 0
      %p51 = por %p49, %p50
      %s53 = sadd.s32 %s52, 1
      %p56 = scmp.eq.s32.totalorder %s18, 7
      %p57 = scmp.ne.s32.totalorder %s52, %s54
      %p58 = scmp.eq.s32.totalorder %s18, 0
      %p59 = por %p57, %p58
      %p60 = scmp.ne.s32.totalorder %s52, %s54
      %p61 = scmp.eq.s32.totalorder %s23, 7
      %p62 = por %p60, %p61
      %p63 = scmp.ne.s32.totalorder %s54, %s55
      %p64 = scmp.eq.s32.totalorder %s23, 0
      %p65 = por %p63, %p64
      %p66 = scmp.ne.s32.totalorder %s54, %s55
      %p67 = scmp.eq.s32.totalorder %s24, 7
      %p68 = por %p66, %p67
      %p70 = scmp.ne.s32.totalorder %s55, %s69
      %p71 = scmp.eq.s32.totalorder %s24, 0
      %p72 = por %p70, %p71
      %s74 = sadd.s32 %s73, 1
      %p77 = scmp.eq.s32.totalorder %s18, 7
      %p78 = scmp.ne.s32.totalorder %s73, %s75
      %p79 = scmp.eq.s32.totalorder %s18, 0
      %p80 = por %p78, %p79
      %p81 = scmp.ne.s32.totalorder %s73, %s75
      %p82 = scmp.eq.s32.totalorder %s23, 7
      %p83 = por %p81, %p82
      %p84 = scmp.ne.s32.totalorder %s75, %s76
      %p85 = scmp.eq.s32.totalorder %s23, 0
      %p86 = por %p84, %p85
      %p87 = scmp.ne.s32.totalorder %s75, %s76
      %p88 = scmp.eq.s32.totalorder %s24, 7
      %p89 = por %p87, %p88
      %p91 = scmp.ne.s32.totalorder %s76, %s90
      %p92 = scmp.eq.s32.totalorder %s24, 0
      %p93 = por %p91, %p92
      %s95 = sadd.s32 %s94, 1
      %p98 = scmp.eq.s32.totalorder %s18, 7
      %p99 = scmp.ne.s32.totalorder %s94, %s96
      %p100 = scmp.eq.s32.totalorder %s18, 0
      %p101 = por %p99, %p100
      %p102 = scmp.ne.s32.totalorder %s94, %s96
      %p103 = scmp.eq.s32.totalorder %s23, 7
      %p104 = por %p102, %p103
      %p105 = scmp.ne.s32.totalorder %s96, %s97
      %p106 = scmp.eq.s32.totalorder %s23, 0
      %p107 = por %p105, %p106
      %p108 = scmp.ne.s32.totalorder %s96, %s97
      %p109 = scmp.eq.s32.totalorder %s24, 7
      %p110 = por %p108, %p109
      %p112 = scmp.ne.s32.totalorder %s97, %s111
      %p113 = scmp.eq.s32.totalorder %s24, 0
      %p114 = por %p112, %p113
      %s116 = sadd.s32 %s115, 1
      %p119 = scmp.eq.s32.totalorder %s18, 7
      %p120 = scmp.ne.s32.totalorder %s115, %s117
      %p121 = scmp.eq.s32.totalorder %s18, 0
      %p122 = por %p120, %p121
      %p123 = scmp.ne.s32.totalorder %s115, %s117
      %p124 = scmp.eq.s32.totalorder %s23, 7
      %p125 = por %p123, %p124
      %p126 = scmp.ne.s32.totalorder %s117, %s118
      %p127 = scmp.eq.s32.totalorder %s23, 0
      %p128 = por %p126, %p127
      %p129 = scmp.ne.s32.totalorder %s117, %s118
      %p130 = scmp.eq.s32.totalorder %s24, 7
      %p131 = por %p129, %p130
      %p133 = scmp.ne.s32.totalorder %s118, %s132
      %p134 = scmp.eq.s32.totalorder %s24, 0
      %p135 = por %p133, %p134
      %s136 = ssub.s32 %s18, %s25
      %p137 = scmp.eq.s32.totalorder %s136, 0
      %s139 = sadd.s32 %s138, 1
      %s140 = scalar_select %p137, %s138, %s139
      %p143 = pneg %p137
      %p144 = scmp.eq.s32.totalorder %s18, 7
      %p145 = por %p143, %p144
      %p146 = scmp.ne.s32.totalorder %s138, %s141
      %p147 = scmp.eq.s32.totalorder %s18, 0
      %p148 = por %p146, %p147
      %p149 = scmp.ne.s32.totalorder %s138, %s141
      %p150 = scmp.eq.s32.totalorder %s23, 7
      %p151 = por %p149, %p150
      %p152 = scmp.ne.s32.totalorder %s141, %s142
      %p153 = scmp.eq.s32.totalorder %s23, 0
      %p154 = por %p152, %p153
      %p155 = scmp.ne.s32.totalorder %s141, %s142
      %p156 = scmp.eq.s32.totalorder %s24, 7
      %p157 = por %p155, %p156
      %p159 = scmp.ne.s32.totalorder %s142, %s158
      %p160 = scmp.eq.s32.totalorder %s24, 0
      %p161 = por %p159, %p160
      %p162 = scmp.le.s32.totalorder 1, %s18
      %p163 = scmp.lt.s32.totalorder %s18, 9
      %p164 = pnand %p162, %p163
      %p165 = pneg %p164
      // Predicated region
      $region9: #{tpu_custom_call.1} parent=5 // pred_check
        _
      $region10: #{tpu_custom_call.1} parent=5 // pred_check_branch
        %167 = sbr.rel (%p164) target = $region12
      $region11: #{tpu_custom_call.1} parent=5 // pred_region
        %s168 = ssub.s32 %s18, 1
        // Predicated region
        $region13: #{tpu_custom_call.1} parent=11 // pred_check
          %p169 = pneg %p65
        $region14: #{tpu_custom_call.1} parent=11 // pred_check_branch
          %171 = sbr.rel (%p169) target = $region16
        $region15: #{tpu_custom_call.1} parent=11 // pred_region
          %s173 = ssub.s32 4096, 4096
          %174 = vsyncadd [#allocation6], %s173
          %s175 = sshll.u32 [#allocation5], 4
          %s176 = int_to_ptr.vmem [resolvable:$true] %s175
          %181 = dma.hbm_to_vmem [thread:$0]  %s1, 4096, %s176, [#allocation6], 256, 256, 16
        $region16: #{tpu_custom_call.1} parent=11 // pred_fallthru
          _
        // Predicated region
        $region17: #{tpu_custom_call.1} parent=11 // pred_check
          %p182 = pneg %p86
        $region18: #{tpu_custom_call.1} parent=11 // pred_check_branch
          %184 = sbr.rel (%p182) target = $region20
        $region19: #{tpu_custom_call.1} parent=11 // pred_region
          _
        $region20: #{tpu_custom_call.1} parent=11 // pred_fallthru
          _
        // Predicated region
        $region21: #{tpu_custom_call.1} parent=11 // pred_check
          %p185 = pneg %p107
        $region22: #{tpu_custom_call.1} parent=11 // pred_check_branch
          %187 = sbr.rel (%p185) target = $region24
        $region23: #{tpu_custom_call.1} parent=11 // pred_region
          %s189 = ssub.s32 4096, 4096
          %190 = vsyncadd [#allocation6], %s189
          %s191 = sshll.u32 [#allocation7], 4
          %s192 = int_to_ptr.vmem [resolvable:$true] %s191
          %197 = dma.hbm_to_vmem [thread:$0]  %s3, 4096, %s192, [#allocation6], 128, 128, 8
        $region24: #{tpu_custom_call.1} parent=11 // pred_fallthru
          _
        // Predicated region
        $region25: #{tpu_custom_call.1} parent=11 // pred_check
          %p198 = pneg %p128
        $region26: #{tpu_custom_call.1} parent=11 // pred_check_branch
          %200 = sbr.rel (%p198) target = $region28
        $region27: #{tpu_custom_call.1} parent=11 // pred_region
          _
        $region28: #{tpu_custom_call.1} parent=11 // pred_fallthru
          _
      $region12: #{tpu_custom_call.1} parent=5 // pred_fallthru
        _
      %p201 = scmp.lt.s32.totalorder %s18, 8
      // Predicated region
      $region29: #{tpu_custom_call.1} parent=5 // pred_check
        %p202 = pneg %p201
      $region30: #{tpu_custom_call.1} parent=5 // pred_check_branch
        %204 = sbr.rel (%p202) target = $region32
      $region31: #{tpu_custom_call.1} parent=5 // pred_region
        // Predicated region
        $region33: #{tpu_custom_call.1} parent=31 // pred_check
          %p205 = pneg %p38
        $region34: #{tpu_custom_call.1} parent=31 // pred_check_branch
          %207 = sbr.rel (%p205) target = $region36
        $region35: #{tpu_custom_call.1} parent=31 // pred_region
          %s208 = sand.u32 %s28, 1
          %s209 = scalar_lea.sflag [#allocation3], %s208
          %s210 = sand.u32 %s28, 1
          %s211 = smul.addr %s210, 64
          %s212 = scalar_lea.vmem [#allocation2], %s211
          %s213 = smul.u32 8, %s18
          %s215 = ssub.s32 1024, 1024
          %216 = vsyncadd %s209, %s215
          %s217 = smul.addr %s213, 128
          %s218 = scalar_lea.hbm %s0, %s217
          %s219 = sshll.u32 %s212, 4
          %s220 = int_to_ptr.vmem [resolvable:$true] %s219
          %225 = dma.hbm_to_vmem [thread:$0]  %s218, 1024, %s220, %s209, 128, 128, 8
        $region36: #{tpu_custom_call.1} parent=31 // pred_fallthru
          _
      $region32: #{tpu_custom_call.1} parent=5 // pred_fallthru
        _
      %p226 = scmp.le.s32.totalorder 1, %s18
      %p227 = scmp.lt.s32.totalorder %s18, 9
      %p228 = pnand %p226, %p227
      %p229 = pneg %p228
      // Predicated region
      $region37: #{tpu_custom_call.1} parent=5 // pred_check
        _
      $region38: #{tpu_custom_call.1} parent=5 // pred_check_branch
        %231 = sbr.rel (%p228) target = $region40
      $region39: #{tpu_custom_call.1} parent=5 // pred_region
        %s232 = ssub.s32 %s18, 1
        %s233 = sand.u32 %s31, 1
        %s234 = scalar_lea.sflag [#allocation3], %s233
        %s235 = sand.u32 %s31, 1
        %s236 = smul.addr %s235, 64
        %s237 = scalar_lea.vmem [#allocation2], %s236
        // Predicated region
        $region41: #{tpu_custom_call.1} parent=39 // pred_check
          %p238 = pneg %p44
        $region42: #{tpu_custom_call.1} parent=39 // pred_check_branch
          %240 = sbr.rel (%p238) target = $region44
        $region43: #{tpu_custom_call.1} parent=39 // pred_region
          %241 = dma.done %s234, 1024
        $region44: #{tpu_custom_call.1} parent=39 // pred_fallthru
          _
        // Predicated region
        $region45: #{tpu_custom_call.1} parent=39 // pred_check
          %p242 = pneg %p65
        $region46: #{tpu_custom_call.1} parent=39 // pred_check_branch
          %244 = sbr.rel (%p242) target = $region48
        $region47: #{tpu_custom_call.1} parent=39 // pred_region
          %245 = dma.done [#allocation6], 4096
        $region48: #{tpu_custom_call.1} parent=39 // pred_fallthru
          _
        // Predicated region
        $region49: #{tpu_custom_call.1} parent=39 // pred_check
          %p246 = pneg %p107
        $region50: #{tpu_custom_call.1} parent=39 // pred_check_branch
          %248 = sbr.rel (%p246) target = $region52
        $region51: #{tpu_custom_call.1} parent=39 // pred_region
          %249 = dma.done [#allocation6], 4096
        $region52: #{tpu_custom_call.1} parent=39 // pred_fallthru
          _
        %s250 = sand.u32 %s31, 1
        %s251 = scalar_lea.sflag [#allocation3], %s250
        %s252 = sand.u32 %s31, 1
        %s253 = smul.addr %s252, 64
        %s254 = scalar_lea.vmem [#allocation2], %s253
        %p255 = pneg %p44
        %p256 = pneg %p41
        %p257 = pneg %p65
        %p258 = pneg %p62
        %p259 = pneg %p86
        %p260 = pneg %p83
        %p261 = pneg %p107
        %p262 = pneg %p104
        %p263 = pneg %p128
        %p264 = pneg %p125
        %p265 = pneg %p154
        %p266 = pneg %p151
        %s267 = sand.u32 %s141, 1
        %s268 = scalar_lea.sflag [#allocation4], %s267
        %s269 = sand.u32 %s141, 1
        %s270 = smul.addr %s269, 64
        %s271 = scalar_lea.vmem [#allocation8], %s270
        %s272 = smul.u32 8, %s23
        %s273 = smul.u32 8, %s23
        %v274 = vld [vmem:[%s237] sm:$0xff]
        %v275 = vld [vmem:[%s237 + $0x8] sm:$0xff]
        %v276 = vld [vmem:[%s237 + $0x10] sm:$0xff]
        %v277 = vld [vmem:[%s237 + $0x18] sm:$0xff]
        %v278 = vld [vmem:[%s237 + $0x20] sm:$0xff]
        %v279 = vld [vmem:[%s237 + $0x28] sm:$0xff]
        %v280 = vld [vmem:[%s237 + $0x30] sm:$0xff]
        %v281 = vld [vmem:[%s237 + $0x38] sm:$0xff]
        %v282 = vld [vmem:[#allocation5] sm:$0xff]
        %v283 = vld [vmem:[#allocation5 + $0x8] sm:$0xff]
        %v284 = vld [vmem:[#allocation5 + $0x10] sm:$0xff]
        %v285 = vld [vmem:[#allocation5 + $0x18] sm:$0xff]
        %v286 = vld [vmem:[#allocation5 + $0x20] sm:$0xff]
        %v287 = vld [vmem:[#allocation5 + $0x28] sm:$0xff]
        %v288 = vld [vmem:[#allocation5 + $0x30] sm:$0xff]
        %v289 = vld [vmem:[#allocation5 + $0x38] sm:$0xff]
        %v290 = vld [vmem:[#allocation5 + $0x40] sm:$0xff]
        %v291 = vld [vmem:[#allocation5 + $0x48] sm:$0xff]
        %v292 = vld [vmem:[#allocation5 + $0x50] sm:$0xff]
        %v293 = vld [vmem:[#allocation5 + $0x58] sm:$0xff]
        %v294 = vld [vmem:[#allocation5 + $0x60] sm:$0xff]
        %v295 = vld [vmem:[#allocation5 + $0x68] sm:$0xff]
        %v296 = vld [vmem:[#allocation5 + $0x70] sm:$0xff]
        %v297 = vld [vmem:[#allocation5 + $0x78] sm:$0xff]
        %v298 = vld [vmem:[#allocation5 + $0x80] sm:$0xff]
        %v299 = vld [vmem:[#allocation5 + $0x88] sm:$0xff]
        %v300 = vld [vmem:[#allocation5 + $0x90] sm:$0xff]
        %v301 = vld [vmem:[#allocation5 + $0x98] sm:$0xff]
        %v302 = vld [vmem:[#allocation5 + $0xa0] sm:$0xff]
        %v303 = vld [vmem:[#allocation5 + $0xa8] sm:$0xff]
        %v304 = vld [vmem:[#allocation5 + $0xb0] sm:$0xff]
        %v305 = vld [vmem:[#allocation5 + $0xb8] sm:$0xff]
        %v306 = vld [vmem:[#allocation5 + $0xc0] sm:$0xff]
        %v307 = vld [vmem:[#allocation5 + $0xc8] sm:$0xff]
        %v308 = vld [vmem:[#allocation5 + $0xd0] sm:$0xff]
        %v309 = vld [vmem:[#allocation5 + $0xd8] sm:$0xff]
        %v310 = vld [vmem:[#allocation5 + $0xe0] sm:$0xff]
        %v311 = vld [vmem:[#allocation5 + $0xe8] sm:$0xff]
        %v312 = vld [vmem:[#allocation5 + $0xf0] sm:$0xff]
        %v313 = vld [vmem:[#allocation5 + $0xf8] sm:$0xff]
        %v314 = vld [vmem:[%s2] sm:$0x3]
        %v316 = vlaneseq
        %v317 = vshrl.u32 %v316, 7
        %v318 = vsub.s32 0, %v317
        %v319 = vrot.slane %v314, %v318
        %v320 = vlaneseq
        %v321 = vshrl.u32 %v320, 7
        %v322 = vsub.s32 1, %v321
        %v323 = vrot.slane %v314, %v322
        %326 = vmatprep.subr.mxu0 %v283
        %327 = vmatpush1.msra.mxu0 %v282
        %328 = vmatprep.subr.mxu0 %v285
        %329 = vmatpush1.msra.mxu0 %v284
        %330 = vmatprep.subr.mxu0 %v287
        %331 = vmatpush1.msra.mxu0 %v286
        %332 = vmatprep.subr.mxu0 %v289
        %333 = vmatpush1.msra.mxu0 %v288
        %334 = vmatprep.subr.mxu0 %v291
        %335 = vmatpush1.msra.mxu0 %v290
        %336 = vmatprep.subr.mxu0 %v293
        %337 = vmatpush1.msra.mxu0 %v292
        %338 = vmatprep.subr.mxu0 %v295
        %339 = vmatpush1.msra.mxu0 %v294
        %340 = vmatprep.subr.mxu0 %v297
        %341 = vmatpush1.msra.mxu0 %v296
        %342 = vmatprep.subr.mxu0 %v299
        %343 = vmatpush1.msra.mxu0 %v298
        %344 = vmatprep.subr.mxu0 %v301
        %345 = vmatpush1.msra.mxu0 %v300
        %346 = vmatprep.subr.mxu0 %v303
        %347 = vmatpush1.msra.mxu0 %v302
        %348 = vmatprep.subr.mxu0 %v305
        %349 = vmatpush1.msra.mxu0 %v304
        %350 = vmatprep.subr.mxu0 %v307
        %351 = vmatpush1.msra.mxu0 %v306
        %352 = vmatprep.subr.mxu0 %v309
        %353 = vmatpush1.msra.mxu0 %v308
        %354 = vmatprep.subr.mxu0 %v311
        %355 = vmatpush1.msra.mxu0 %v310
        %356 = vmatprep.subr.mxu0 %v313
        %357 = vmatpush1.msra.mxu0 %v312
        %358 = vmatprep.subr.mxu0 0.0
        %359 = vmatpush1.msra.mxu0 0.0
        %360 = vmatprep.subr.mxu0 0.0
        %361 = vmatpush1.msra.mxu0 0.0
        %362 = vmatprep.subr.mxu0 0.0
        %363 = vmatpush1.msra.mxu0 0.0
        %364 = vmatprep.subr.mxu0 0.0
        %365 = vmatpush1.msra.mxu0 0.0
        %366 = vmatprep.subr.mxu0 0.0
        %367 = vmatpush1.msra.mxu0 0.0
        %368 = vmatprep.subr.mxu0 0.0
        %369 = vmatpush1.msra.mxu0 0.0
        %370 = vmatprep.subr.mxu0 0.0
        %371 = vmatpush1.msra.mxu0 0.0
        %372 = vmatprep.subr.mxu0 0.0
        %373 = vmatpush1.msra.mxu0 0.0
        %374 = vmatprep.subr.mxu0 0.0
        %375 = vmatpush1.msra.mxu0 0.0
        %376 = vmatprep.subr.mxu0 0.0
        %377 = vmatpush1.msra.mxu0 0.0
        %378 = vmatprep.subr.mxu0 0.0
        %379 = vmatpush1.msra.mxu0 0.0
        %380 = vmatprep.subr.mxu0 0.0
        %381 = vmatpush1.msra.mxu0 0.0
        %382 = vmatprep.subr.mxu0 0.0
        %383 = vmatpush1.msra.mxu0 0.0
        %384 = vmatprep.subr.mxu0 0.0
        %385 = vmatpush1.msra.mxu0 0.0
        %386 = vmatprep.subr.mxu0 0.0
        %387 = vmatpush1.msra.mxu0 0.0
        %388 = vmatprep.subr.mxu0 0.0
        %389 = vmatpush1.msra.mxu0 0.0
        %390 = vmatprep.mubr.f32.mxu0 0.0
        %391 = vmatmul.mubr.f32.gmra.mrb[0].mxu0 %v274
        %v392 = vpop.f32.mrb[0].mxu0
        %v393 = vadd.f32 %v319, %v392
        %v394 = vpop.f32.mrb[0].mxu0
        %v395 = vadd.f32 %v323, %v394
        %396 = vmatprep.mubr.f32.mxu0 0.0
        %397 = vmatmul.mubr.f32.gmra.mrb[0].mxu0 %v275
        %v398 = vpop.f32.mrb[0].mxu0
        %v399 = vadd.f32 %v319, %v398
        %v400 = vpop.f32.mrb[0].mxu0
        %v401 = vadd.f32 %v323, %v400
        %402 = vmatprep.mubr.f32.mxu0 0.0
        %403 = vmatmul.mubr.f32.gmra.mrb[0].mxu0 %v276
        %v404 = vpop.f32.mrb[0].mxu0
        %v405 = vadd.f32 %v319, %v404
        %v406 = vpop.f32.mrb[0].mxu0
        %v407 = vadd.f32 %v323, %v406
        %408 = vmatprep.mubr.f32.mxu0 0.0
        %409 = vmatmul.mubr.f32.gmra.mrb[0].mxu0 %v277
        %v410 = vpop.f32.mrb[0].mxu0
        %v411 = vadd.f32 %v319, %v410
        %v412 = vpop.f32.mrb[0].mxu0
        %v413 = vadd.f32 %v323, %v412
        %414 = vmatprep.mubr.f32.mxu0 0.0
        %415 = vmatmul.mubr.f32.gmra.mrb[0].mxu0 %v278
        %v416 = vpop.f32.mrb[0].mxu0
        %v417 = vadd.f32 %v319, %v416
        %v418 = vpop.f32.mrb[0].mxu0
        %v419 = vadd.f32 %v323, %v418
        %420 = vmatprep.mubr.f32.mxu0 0.0
        %421 = vmatmul.mubr.f32.gmra.mrb[0].mxu0 %v279
        %v422 = vpop.f32.mrb[0].mxu0
        %v423 = vadd.f32 %v319, %v422
        %v424 = vpop.f32.mrb[0].mxu0
        %v425 = vadd.f32 %v323, %v424
        %426 = vmatprep.mubr.f32.mxu0 0.0
        %427 = vmatmul.mubr.f32.gmra.mrb[0].mxu0 %v280
        %v428 = vpop.f32.mrb[0].mxu0
        %v429 = vadd.f32 %v319, %v428
        %v430 = vpop.f32.mrb[0].mxu0
        %v431 = vadd.f32 %v323, %v430
        %432 = vmatprep.mubr.f32.mxu0 0.0
        %433 = vmatmul.mubr.f32.gmra.mrb[0].mxu0 %v281
        %v434 = vpop.f32.mrb[0].mxu0
        %v435 = vadd.f32 %v319, %v434
        %v436 = vpop.f32.mrb[0].mxu0
        %v437 = vadd.f32 %v323, %v436
        %438 = vdwg.mxu0
        %v439 = vmax.f32 %v393, 0.0
        %v440 = vmax.f32 %v395, 0.0
        %v441 = vmax.f32 %v399, 0.0
        %v442 = vmax.f32 %v401, 0.0
        %v443 = vmax.f32 %v405, 0.0
        %v444 = vmax.f32 %v407, 0.0
        %v445 = vmax.f32 %v411, 0.0
        %v446 = vmax.f32 %v413, 0.0
        %v447 = vmax.f32 %v417, 0.0
        %v448 = vmax.f32 %v419, 0.0
        %v449 = vmax.f32 %v423, 0.0
        %v450 = vmax.f32 %v425, 0.0
        %v451 = vmax.f32 %v429, 0.0
        %v452 = vmax.f32 %v431, 0.0
        %v453 = vmax.f32 %v435, 0.0
        %v454 = vmax.f32 %v437, 0.0
        %v455 = vld [vmem:[#allocation7] sm:$0xff]
        %v456 = vld [vmem:[#allocation7 + $0x8] sm:$0xff]
        %v457 = vld [vmem:[#allocation7 + $0x10] sm:$0xff]
        %v458 = vld [vmem:[#allocation7 + $0x18] sm:$0xff]
        %v459 = vld [vmem:[#allocation7 + $0x20] sm:$0xff]
        %v460 = vld [vmem:[#allocation7 + $0x28] sm:$0xff]
        %v461 = vld [vmem:[#allocation7 + $0x30] sm:$0xff]
        %v462 = vld [vmem:[#allocation7 + $0x38] sm:$0xff]
        %v463 = vld [vmem:[#allocation7 + $0x40] sm:$0xff]
        %v464 = vld [vmem:[#allocation7 + $0x48] sm:$0xff]
        %v465 = vld [vmem:[#allocation7 + $0x50] sm:$0xff]
        %v466 = vld [vmem:[#allocation7 + $0x58] sm:$0xff]
        %v467 = vld [vmem:[#allocation7 + $0x60] sm:$0xff]
        %v468 = vld [vmem:[#allocation7 + $0x68] sm:$0xff]
        %v469 = vld [vmem:[#allocation7 + $0x70] sm:$0xff]
        %v470 = vld [vmem:[#allocation7 + $0x78] sm:$0xff]
        %v471 = vld [vmem:[#allocation7 + $0x80] sm:$0xff]
        %v472 = vld [vmem:[#allocation7 + $0x88] sm:$0xff]
        %v473 = vld [vmem:[#allocation7 + $0x90] sm:$0xff]
        %v474 = vld [vmem:[#allocation7 + $0x98] sm:$0xff]
        %v475 = vld [vmem:[#allocation7 + $0xa0] sm:$0xff]
        %v476 = vld [vmem:[#allocation7 + $0xa8] sm:$0xff]
        %v477 = vld [vmem:[#allocation7 + $0xb0] sm:$0xff]
        %v478 = vld [vmem:[#allocation7 + $0xb8] sm:$0xff]
        %v479 = vld [vmem:[#allocation7 + $0xc0] sm:$0xff]
        %v480 = vld [vmem:[#allocation7 + $0xc8] sm:$0xff]
        %v481 = vld [vmem:[#allocation7 + $0xd0] sm:$0xff]
        %v482 = vld [vmem:[#allocation7 + $0xd8] sm:$0xff]
        %v483 = vld [vmem:[#allocation7 + $0xe0] sm:$0xff]
        %v484 = vld [vmem:[#allocation7 + $0xe8] sm:$0xff]
        %v485 = vld [vmem:[#allocation7 + $0xf0] sm:$0xff]
        %v486 = vld [vmem:[#allocation7 + $0xf8] sm:$0xff]
        %v487 = vld [vmem:[%s4] sm:$0x1]
        %v489 = vlaneseq
        %v490 = vshrl.u32 %v489, 7
        %v491 = vsub.s32 0, %v490
        %v492 = vrot.slane %v487, %v491
        %494 = vmatprep.subr.mxu0 0.0
        %495 = vmatpush1.msra.mxu0 %v455
        %496 = vmatprep.subr.mxu0 0.0
        %497 = vmatpush1.msra.mxu0 %v456
        %498 = vmatprep.subr.mxu0 0.0
        %499 = vmatpush1.msra.mxu0 %v457
        %500 = vmatprep.subr.mxu0 0.0
        %501 = vmatpush1.msra.mxu0 %v458
        %502 = vmatprep.subr.mxu0 0.0
        %503 = vmatpush1.msra.mxu0 %v459
        %504 = vmatprep.subr.mxu0 0.0
        %505 = vmatpush1.msra.mxu0 %v460
        %506 = vmatprep.subr.mxu0 0.0
        %507 = vmatpush1.msra.mxu0 %v461
        %508 = vmatprep.subr.mxu0 0.0
        %509 = vmatpush1.msra.mxu0 %v462
        %510 = vmatprep.subr.mxu0 0.0
        %511 = vmatpush1.msra.mxu0 %v463
        %512 = vmatprep.subr.mxu0 0.0
        %513 = vmatpush1.msra.mxu0 %v464
        %514 = vmatprep.subr.mxu0 0.0
        %515 = vmatpush1.msra.mxu0 %v465
        %516 = vmatprep.subr.mxu0 0.0
        %517 = vmatpush1.msra.mxu0 %v466
        %518 = vmatprep.subr.mxu0 0.0
        %519 = vmatpush1.msra.mxu0 %v467
        %520 = vmatprep.subr.mxu0 0.0
        %521 = vmatpush1.msra.mxu0 %v468
        %522 = vmatprep.subr.mxu0 0.0
        %523 = vmatpush1.msra.mxu0 %v469
        %524 = vmatprep.subr.mxu0 0.0
        %525 = vmatpush1.msra.mxu0 %v470
        %526 = vmatprep.subr.mxu0 0.0
        %527 = vmatpush1.msra.mxu0 %v471
        %528 = vmatprep.subr.mxu0 0.0
        %529 = vmatpush1.msra.mxu0 %v472
        %530 = vmatprep.subr.mxu0 0.0
        %531 = vmatpush1.msra.mxu0 %v473
        %532 = vmatprep.subr.mxu0 0.0
        %533 = vmatpush1.msra.mxu0 %v474
        %534 = vmatprep.subr.mxu0 0.0
        %535 = vmatpush1.msra.mxu0 %v475
        %536 = vmatprep.subr.mxu0 0.0
        %537 = vmatpush1.msra.mxu0 %v476
        %538 = vmatprep.subr.mxu0 0.0
        %539 = vmatpush1.msra.mxu0 %v477
        %540 = vmatprep.subr.mxu0 0.0
        %541 = vmatpush1.msra.mxu0 %v478
        %542 = vmatprep.subr.mxu0 0.0
        %543 = vmatpush1.msra.mxu0 %v479
        %544 = vmatprep.subr.mxu0 0.0
        %545 = vmatpush1.msra.mxu0 %v480
        %546 = vmatprep.subr.mxu0 0.0
        %547 = vmatpush1.msra.mxu0 %v481
        %548 = vmatprep.subr.mxu0 0.0
        %549 = vmatpush1.msra.mxu0 %v482
        %550 = vmatprep.subr.mxu0 0.0
        %551 = vmatpush1.msra.mxu0 %v483
        %552 = vmatprep.subr.mxu0 0.0
        %553 = vmatpush1.msra.mxu0 %v484
        %554 = vmatprep.subr.mxu0 0.0
        %555 = vmatpush1.msra.mxu0 %v485
        %556 = vmatprep.subr.mxu0 0.0
        %557 = vmatpush1.msra.mxu0 %v486
        %558 = vmatprep.mubr.f32.mxu0 %v440
        %559 = vmatmul.mubr.f32.gmra.mrb[0].mxu0 %v439
        %v560 = vpop.f32.mrb[0].mxu0
        %v561 = vadd.f32 %v492, %v560
        %v562 = vpop.f32.mrb[0].mxu0
        %563 = vmatprep.mubr.f32.mxu0 %v442
        %564 = vmatmul.mubr.f32.gmra.mrb[0].mxu0 %v441
        %v565 = vpop.f32.mrb[0].mxu0
        %v566 = vadd.f32 %v492, %v565
        %v567 = vpop.f32.mrb[0].mxu0
        %568 = vmatprep.mubr.f32.mxu0 %v444
        %569 = vmatmul.mubr.f32.gmra.mrb[0].mxu0 %v443
        %v570 = vpop.f32.mrb[0].mxu0
        %v571 = vadd.f32 %v492, %v570
        %v572 = vpop.f32.mrb[0].mxu0
        %573 = vmatprep.mubr.f32.mxu0 %v446
        %574 = vmatmul.mubr.f32.gmra.mrb[0].mxu0 %v445
        %v575 = vpop.f32.mrb[0].mxu0
        %v576 = vadd.f32 %v492, %v575
        %v577 = vpop.f32.mrb[0].mxu0
        %578 = vmatprep.mubr.f32.mxu0 %v448
        %579 = vmatmul.mubr.f32.gmra.mrb[0].mxu0 %v447
        %v580 = vpop.f32.mrb[0].mxu0
        %v581 = vadd.f32 %v492, %v580
        %v582 = vpop.f32.mrb[0].mxu0
        %583 = vmatprep.mubr.f32.mxu0 %v450
        %584 = vmatmul.mubr.f32.gmra.mrb[0].mxu0 %v449
        %v585 = vpop.f32.mrb[0].mxu0
        %v586 = vadd.f32 %v492, %v585
        %v587 = vpop.f32.mrb[0].mxu0
        %588 = vmatprep.mubr.f32.mxu0 %v452
        %589 = vmatmul.mubr.f32.gmra.mrb[0].mxu0 %v451
        %v590 = vpop.f32.mrb[0].mxu0
        %v591 = vadd.f32 %v492, %v590
        %v592 = vpop.f32.mrb[0].mxu0
        %593 = vmatprep.mubr.f32.mxu0 %v454
        %594 = vmatmul.mubr.f32.gmra.mrb[0].mxu0 %v453
        %v595 = vpop.f32.mrb[0].mxu0
        %v596 = vadd.f32 %v492, %v595
        %v597 = vpop.f32.mrb[0].mxu0
        %598 = vdwg.mxu0
        %599 = vst [vmem:[%s271] sm:$0xff] %v561
        %600 = vst [vmem:[%s271 + $0x8] sm:$0xff] %v566
        %601 = vst [vmem:[%s271 + $0x10] sm:$0xff] %v571
        %602 = vst [vmem:[%s271 + $0x18] sm:$0xff] %v576
        %603 = vst [vmem:[%s271 + $0x20] sm:$0xff] %v581
        %604 = vst [vmem:[%s271 + $0x28] sm:$0xff] %v586
        %605 = vst [vmem:[%s271 + $0x30] sm:$0xff] %v591
        %606 = vst [vmem:[%s271 + $0x38] sm:$0xff] %v596
        %s607 = sand.u32 %s141, 1
        %s608 = scalar_lea.sflag [#allocation4], %s607
        %s609 = sand.u32 %s141, 1
        %s610 = smul.addr %s609, 64
        %s611 = scalar_lea.vmem [#allocation8], %s610
        // Predicated region
        $region53: #{tpu_custom_call.1} parent=39 // pred_check
          %p612 = pneg %p151
        $region54: #{tpu_custom_call.1} parent=39 // pred_check_branch
          %614 = sbr.rel (%p612) target = $region56
        $region55: #{tpu_custom_call.1} parent=39 // pred_region
          %s615 = smul.u32 8, %s23
          %s617 = ssub.s32 1024, 1024
          %618 = vsyncadd %s608, %s617
          %s619 = smul.addr %s615, 128
          %s620 = scalar_lea.hbm %s5, %s619
          %s621 = sshll.u32 %s611, 4
          %s622 = int_to_ptr.vmem [resolvable:$true] %s621
          %627 = dma.vmem_to_hbm [thread:$0]  %s622, 1024, %s620, %s608, 128, 128, 8
        $region56: #{tpu_custom_call.1} parent=39 // pred_fallthru
          _
      $region40: #{tpu_custom_call.1} parent=5 // pred_fallthru
        _
      %p628 = scmp.le.s32.totalorder 2, %s18
      // Predicated region
      $region57: #{tpu_custom_call.1} parent=5 // pred_check
        %p629 = pneg %p628
      $region58: #{tpu_custom_call.1} parent=5 // pred_check_branch
        %631 = sbr.rel (%p629) target = $region60
      $region59: #{tpu_custom_call.1} parent=5 // pred_region
        %s632 = ssub.s32 %s18, 2
        // Predicated region
        $region61: #{tpu_custom_call.1} parent=59 // pred_check
          %p633 = pneg %p157
        $region62: #{tpu_custom_call.1} parent=59 // pred_check_branch
          %635 = sbr.rel (%p633) target = $region64
        $region63: #{tpu_custom_call.1} parent=59 // pred_region
          %s636 = sand.u32 %s142, 1
          %s637 = scalar_lea.sflag [#allocation4], %s636
          %s638 = sand.u32 %s142, 1
          %s639 = smul.addr %s638, 64
          %s640 = scalar_lea.vmem [#allocation8], %s639
          %641 = dma.done %s637, 1024
        $region64: #{tpu_custom_call.1} parent=59 // pred_fallthru
          _
      $region60: #{tpu_custom_call.1} parent=5 // pred_fallthru
        _
    $region6: #{tpu_custom_call.1} parent=1 // loop_footer
      %s22 = sadd.s32 1, %s18
    $region7: #{tpu_custom_call.1} parent=1 // loop_footer_branch
      %17 = sbr.rel target = $region3
    $region8: #{tpu_custom_call.1} parent=1 // loop_exit
      _
    %642 = vsyncpa [#allocation3], 1
    %s643 = scalar_lea.sflag [#allocation3], 1
    %644 = vsyncpa %s643, 1
    %645 = vsyncpa [#allocation6], 1
    %646 = vsyncpa [#allocation4], 1
    %s647 = scalar_lea.sflag [#allocation4], 1
    %648 = vsyncpa %s647, 1

</llo_original>
